<compile_context>
chip_gen: v6e
topology: v6e:2x2x1
jax: 0.10.0
libtpu: 0.0.40
codegen_flags: <defaults>
</compile_context>

<pallas_src>
import jax
import jax.numpy as jnp
from jax.experimental import pallas as pl
from jax.experimental.pallas import tpu as pltpu


def _conv_bn_relu_kernel(x_ref, b_ref, sb_ref, o_ref):
    # x_ref:  (R, k*Wp*Cin)      dy-im2col'd activation rows (R = NB*H), bf16
    # b_ref:  (k*Wp*Cin, W*Cout) block-Toeplitz weights, bf16 (grid-invariant)
    # sb_ref: (2, W*Cout)        row 0 = folded BN scale, row 1 = bias, f32
    # o_ref:  (R, W*Cout)        lane-dense output rows, bf16
    acc = jnp.dot(x_ref[...], b_ref[...], preferred_element_type=jnp.float32)
    y = acc * sb_ref[0:1, :] + sb_ref[1:2, :]          # BN fold (f32)
    o_ref[...] = jnp.maximum(y, 0.0).astype(o_ref.dtype)   # ReLU + bf16 store


def prepare_conv_c3_params(weight_oihw, gamma, beta, run_mean, run_var,
                           *, W, k=1, eps=1e-5):
    """Precompute the block-Toeplitz weight matrix and folded-BN scale/bias.

    Weights and BN statistics are static at inference time -> call once at
    weight-load time and reuse across forward calls (keeps the Toeplitz einsum
    off the hot path).
    """
    assert k % 2 == 1, "autopad 'same' padding assumes odd kernel size"
    Cout, Cin, kh, kw = weight_oihw.shape
    assert kh == k and kw == k
    p = k // 2
    Wp = W + 2 * p

    # B[dy*Wp*Cin + a*Cin + ci, w*Cout + co] = W_hwio[dy, dx, ci, co], a == w + dx
    # TODO(synk): at production Cin/Cout on v5e the ~Wp/k structural-zero FLOP
    #             inflation can become MXU-bound; switch to per-dx (Cin->Cout)
    #             matmuls (K = k*Cin) or W-strip Toeplitz there.
    w_hwio = jnp.transpose(weight_oihw, (2, 3, 1, 0)).astype(jnp.float32)  # (k,k,Cin,Cout)
    a_idx = jnp.arange(Wp)[:, None, None]
    w_idx = jnp.arange(W)[None, :, None]
    dx_idx = jnp.arange(k)[None, None, :]
    sel = (a_idx == w_idx + dx_idx).astype(jnp.float32)           # (Wp, W, k)
    B = jnp.einsum('awx,yxic->yaiwc', sel, w_hwio)                # (k, Wp, Cin, W, Cout)
    B = B.reshape(k * Wp * Cin, W * Cout).astype(jnp.bfloat16)

    # Fold inference-mode BatchNorm into per-channel scale/bias, tiled over w.
    scale = (gamma / jnp.sqrt(run_var + eps)).astype(jnp.float32)
    bias = (beta - run_mean * scale).astype(jnp.float32)
    scale_bias = jnp.stack([jnp.tile(scale, W), jnp.tile(bias, W)])  # (2, W*Cout)
    return B, scale_bias


def _pick_batch_tile(N, H, target_rows=128):
    """Batch elements per grid step: smallest divisor of N reaching >=target_rows
    MXU rows (keeps grid steps for pipelining at large N), else the largest."""
    candidates = [d for d in range(1, N + 1)
                  if N % d == 0 and ((d * H) % 8 == 0 or d == N)]
    for d in candidates:
        if d * H >= target_rows:
            return d
    return candidates[-1]


def conv_c3_forward(x_nchw, B, scale_bias, *, k=1, s=1):
    """Forward pass of Conv_C3 (eval-mode BN folded), NCHW in -> NCHW out (bf16)."""
    # TODO(synk): stride > 1 and grouped conv (g > 1) not implemented
    # (module defaults are s=1, g=1).
    assert s == 1
    N, Cin, H, W = x_nchw.shape
    p = k // 2
    Wp = W + 2 * p
    kwc = k * Wp * Cin
    wcout = scale_bias.shape[-1]
    Cout = wcout // W
    assert B.shape == (kwc, wcout)

    # --- activations: NCHW -> NHWC(bf16) -> pad -> dy-im2col -> (N*H, k*Wp*Cin)
    # TODO(synk): when chaining NHWC/bf16 layers keep this lane-packed slab
    #             end-to-end and drop the transposes (they dominate wall clock
    #             for a single small layer).
    x = jnp.transpose(x_nchw, (0, 2, 3, 1)).astype(jnp.bfloat16)
    x = jnp.pad(x, ((0, 0), (p, p), (p, p), (0, 0)))                # (N, Hp, Wp, Cin)
    x = jnp.stack([x[:, dy:dy + H] for dy in range(k)], axis=2)     # (N, H, k, Wp, Cin)
    x_lhs = x.reshape(N * H, kwc)

    nb = _pick_batch_tile(N, H)
    rows = nb * H
    grid = (N // nb,)

    # Advisory cost: the actual Toeplitz-matmul MXU work, not the useful-conv count.
    flops = 2 * (N * H) * kwc * wcout
    bytes_accessed = (x_lhs.size * 2 + B.size * 2 + scale_bias.size * 4
                      + (N * H) * wcout * 2)

    out_lp = pl.pallas_call(
        _conv_bn_relu_kernel,
        out_shape=jax.ShapeDtypeStruct((N * H, wcout), jnp.bfloat16),
        grid_spec=pltpu.PrefetchScalarGridSpec(
            num_scalar_prefetch=0,
            grid=grid,
            in_specs=[
                pl.BlockSpec((rows, kwc), lambda i: (i, 0)),
                # B / scale_bias are grid-invariant (index_map constant -> stay
                # resident in VMEM across grid steps).
                # TODO(synk): at production channel counts, add a W/Cout grid
                #             axis with a matching B BlockSpec and mark it
                #             pipeline_mode=pl.Buffered(1) so B fits v7x's
                #             64 MiB VMEM.
                pl.BlockSpec((kwc, wcout), lambda i: (0, 0)),
                pl.BlockSpec((2, wcout), lambda i: (0, 0)),
            ],
            out_specs=pl.BlockSpec((rows, wcout), lambda i: (i, 0)),
        ),
        compiler_params=pltpu.CompilerParams(
            dimension_semantics=("parallel",),
            vmem_limit_bytes=32 * 1024 * 1024),
        cost_estimate=pl.CostEstimate(
            flops=flops, transcendentals=0, bytes_accessed=bytes_accessed),
    )(x_lhs, B, scale_bias)

    # lane-packed (N*H, W*Cout) -> NHWC -> NCHW (PyTorch output convention), bf16
    out = out_lp.reshape(N, H, W, Cout)
    return jnp.transpose(out, (0, 3, 1, 2))


def _reference(x_nchw, weight_oihw, gamma, beta, run_mean, run_var, *, k, eps=1e-5):
    # Reference uses the same bf16-rounded operands as the kernel (f32 accumulate).
    p = k // 2
    xq = x_nchw.astype(jnp.bfloat16).astype(jnp.float32)
    wq = weight_oihw.astype(jnp.bfloat16).astype(jnp.float32)
    y = jax.lax.conv_general_dilated(
        xq, wq, window_strides=(1, 1), padding=((p, p), (p, p)),
        dimension_numbers=("NCHW", "OIHW", "NCHW"))
    scale = gamma / jnp.sqrt(run_var + eps)
    bias = beta - run_mean * scale
    y = y * scale[None, :, None, None] + bias[None, :, None, None]
    return jnp.maximum(y, 0.0)


def _run_case(key, c1, c2, k, N, H, W):
    kx, kw, kg, kb, km, kv = jax.random.split(key, 6)
    x = jax.random.normal(kx, (N, c1, H, W), jnp.float32)
    weight = jax.random.normal(kw, (c2, c1, k, k), jnp.float32) * 0.1
    gamma = jax.random.uniform(kg, (c2,), jnp.float32, 0.5, 1.5)
    beta = jax.random.normal(kb, (c2,), jnp.float32) * 0.1
    run_mean = jax.random.normal(km, (c2,), jnp.float32) * 0.1
    run_var = jax.random.uniform(kv, (c2,), jnp.float32, 0.5, 1.5)

    # Weight-side prep happens once (static at inference time).
    B, scale_bias = prepare_conv_c3_params(
        weight, gamma, beta, run_mean, run_var, W=W, k=k)

    out = conv_c3_forward(x, B, scale_bias, k=k, s=1)
    out = jax.block_until_ready(out)

    ref = _reference(x, weight, gamma, beta, run_mean, run_var, k=k)
    assert out.shape == (N, c2, H, W), out.shape
    out_f32 = out.astype(jnp.float32)
    err = float(jnp.max(jnp.abs(out_f32 - ref)))
    # Output is bf16 (per perf review) -> allow bf16-rounding-sized error.
    assert jnp.allclose(out_f32, ref, atol=3e-2, rtol=3e-2), err


if __name__ == "__main__":
    key = jax.random.PRNGKey(0)
    k3, k1 = jax.random.split(key, 2)

    # Conv_C3(c1=4, c2=8, k=3, s=1): bias-free conv + BN(eval) + ReLU.
    _run_case(k3, c1=4, c2=8, k=3, N=2, H=16, W=16)
    # Conv_C3 default kernel size k=1.
    _run_case(k1, c1=4, c2=8, k=1, N=2, H=16, W=16)

    print("KERNEL_OK")
</pallas_src>

<mosaic_0001>
module attributes {stable_mosaic.version = 11 : i64} {
  func.func @_conv_bn_relu_kernel(%arg0: i32, %arg1: memref<32x216xbf16, #tpu.memory_space<vmem>>, %arg2: memref<216x128xbf16, #tpu.memory_space<vmem>>, %arg3: memref<2x128xf32, #tpu.memory_space<vmem>>, %arg4: memref<32x128xbf16, #tpu.memory_space<vmem>>) attributes {dimension_semantics = [#tpu.dimension_semantics<parallel>], iteration_bounds = array<i64: 1>, scalar_prefetch = 0 : i64, scratch_operands = 0 : i64, tpu.core_type = #tpu.core_type<tc>, window_params = [{transform_indices = @transform_0, window_bounds = array<i64: 32, 216>}, {pipeline_mode = #tpu.pipeline_mode<synchronous>, transform_indices = @transform_1, window_bounds = array<i64: 216, 128>}, {pipeline_mode = #tpu.pipeline_mode<synchronous>, transform_indices = @transform_2, window_bounds = array<i64: 2, 128>}, {transform_indices = @transform_3, window_bounds = array<i64: 32, 128>}]} {
    %c0 = arith.constant 0 : index
    %c0_0 = arith.constant 0 : index
    %0 = vector.load %arg1[%c0, %c0_0] : memref<32x216xbf16, #tpu.memory_space<vmem>>, vector<32x216xbf16>
    %c0_1 = arith.constant 0 : index
    %c0_2 = arith.constant 0 : index
    %1 = vector.load %arg2[%c0_1, %c0_2] : memref<216x128xbf16, #tpu.memory_space<vmem>>, vector<216x128xbf16>
    %cst = arith.constant dense<0.000000e+00> : vector<32x128xf32>
    %2 = tpu.matmul %0, %1, %cst {dimension_numbers = #tpu.dot_dimension_numbers<[1], [0], [0], [1], [0, 0, 1, 1], [], []>} : vector<32x216xbf16>, vector<216x128xbf16>, vector<32x128xf32> -> vector<32x128xf32>
    %c0_3 = arith.constant 0 : index
    %c0_4 = arith.constant 0 : index
    %3 = vector.load %arg3[%c0_3, %c0_4] : memref<2x128xf32, #tpu.memory_space<vmem>>, vector<1x128xf32>
    %4 = vector.broadcast %3 : vector<1x128xf32> to vector<32x128xf32>
    %5 = arith.mulf %2, %4 : vector<32x128xf32>
    %c1 = arith.constant 1 : index
    %c0_5 = arith.constant 0 : index
    %6 = vector.load %arg3[%c1, %c0_5] : memref<2x128xf32, #tpu.memory_space<vmem>>, vector<1x128xf32>
    %7 = vector.broadcast %6 : vector<1x128xf32> to vector<32x128xf32>
    %8 = arith.addf %5, %7 : vector<32x128xf32>
    %cst_6 = arith.constant 0.000000e+00 : f32
    %9 = vector.broadcast %cst_6 : f32 to vector<32x128xf32>
    %10 = arith.maximumf %8, %9 : vector<32x128xf32>
    %11 = arith.truncf %10 : vector<32x128xf32> to vector<32x128xbf16>
    %c0_7 = arith.constant 0 : index
    %c0_8 = arith.constant 0 : index
    %12 = vector.load %arg4[%c0_7, %c0_8] : memref<32x128xbf16, #tpu.memory_space<vmem>>, vector<32x128xbf16>
    tpu.vector_store %arg4[%c0_7, %c0_8], %11 {strides = array<i32>} : memref<32x128xbf16, #tpu.memory_space<vmem>>, vector<32x128xbf16>,
    return
  }
  func.func @transform_0(%arg0: i32) -> (i32, i32) {
    %c0_i32 = arith.constant 0 : i32
    %c0_i32_0 = arith.constant 0 : i32
    return %arg0, %c0_i32 : i32, i32
  }
  func.func @transform_1(%arg0: i32) -> (i32, i32) {
    %c0_i32 = arith.constant 0 : i32
    %c0_i32_0 = arith.constant 0 : i32
    %c0_i32_1 = arith.constant 0 : i32
    return %c0_i32, %c0_i32_0 : i32, i32
  }
  func.func @transform_2(%arg0: i32) -> (i32, i32) {
    %c0_i32 = arith.constant 0 : i32
    %c0_i32_0 = arith.constant 0 : i32
    %c0_i32_1 = arith.constant 0 : i32
    return %c0_i32, %c0_i32_0 : i32, i32
  }
  func.func @transform_3(%arg0: i32) -> (i32, i32) {
    %c0_i32 = arith.constant 0 : i32
    %c0_i32_0 = arith.constant 0 : i32
    return %arg0, %c0_i32 : i32, i32
  }
}

</mosaic_0001>

<llo_original>
// kernel: tpu_custom_call.1
$region0: #{tpu_custom_call.1}
  #allocation0 [shape = 'u32[]', space=smem, size = 0x4, offset = 0x4, fixed_abs, tag = 'smem constant byte address 0x4 - core index']
  #allocation1 [shape = 'u32[144,128]{1,0:T(1,128)}', space=vmem, size = 0x12000, scoped, tag = 'internal scratch']
  %s0 = inlined_call_operand.hbm [shape: bf16[32,216], index: 0, kind: input, shape index: {}]
  %s1 = inlined_call_operand.hbm [shape: bf16[216,128], index: 1, kind: input, shape index: {}]
  %s2 = inlined_call_operand.vmem [shape: f32[2,128], index: 2, kind: input, shape index: {}]
  %s3 = inlined_call_operand.hbm [shape: bf16[32,128], index: 3, kind: output, shape index: {}]
  %s4 = sld [smem:[#allocation0]]
  $region30: #{tpu_custom_call.1} parent=0
    _
  %s6 = ssub.s32 1, %s4
  %s7 = scalar_select 0, %s6, %s4
  $region1: #{tpu_custom_call.1} parent=0
    #allocation2 [shape = 'u8[16384]{0}', space=vmem, size = 0x4000, scoped, tag = 'input window, operand 0, single buffered']
    #allocation3 [shape = 's32[1]{0}', space=sflag, size = 0x4, scoped, tag = 'scoped memory for tpu_custom_call.1']
    #allocation4 [shape = 's32[1]{0}', space=sflag, size = 0x4, scoped, tag = 'scoped memory for tpu_custom_call.1']
    #allocation5 [shape = 'u8[55296]{0}', space=vmem, size = 0xd800, scoped, tag = 'input window, operand 1, single buffered']
    #allocation6 [shape = 's32[1]{0}', space=sflag, size = 0x4, scoped, tag = 'scoped memory for tpu_custom_call.1']
    #allocation7 [shape = 'u8[8192]{0}', space=vmem, size = 0x2000, scoped, tag = 'output window, operand 0, single buffered']
    %8 = vsyncpa [#allocation3], 0
    %9 = vsyncpa [#allocation6], 0
    %10 = vsyncpa [#allocation4], 0
    // Predicated region
    $region2: #{tpu_custom_call.1} parent=1 // pred_check
      _
    $region3: #{tpu_custom_call.1} parent=1 // pred_check_branch
      %12 = sbr.rel (0) target = $region5
    $region4: #{tpu_custom_call.1} parent=1 // pred_region
      %s14 = ssub.s32 512, 512
      %15 = vsyncadd [#allocation3], %s14
      %s16 = sshll.u32 [#allocation2], 4
      %s17 = int_to_ptr.vmem [resolvable:$true] %s16
      %22 = dma.hbm_to_vmem [thread:$0]  %s0, 512, %s17, [#allocation3], 128, 128, 8
    $region5: #{tpu_custom_call.1} parent=1 // pred_fallthru
      _
    // Predicated region
    $region6: #{tpu_custom_call.1} parent=1 // pred_check
      _
    $region7: #{tpu_custom_call.1} parent=1 // pred_check_branch
      %24 = sbr.rel (0) target = $region9
    $region8: #{tpu_custom_call.1} parent=1 // pred_region
      %s26 = ssub.s32 1728, 1728
      %27 = vsyncadd [#allocation6], %s26
      %s28 = sshll.u32 [#allocation5], 4
      %s29 = int_to_ptr.vmem [resolvable:$true] %s28
      %34 = dma.hbm_to_vmem [thread:$0]  %s1, 1728, %s29, [#allocation6], 64, 64, 4
    $region9: #{tpu_custom_call.1} parent=1 // pred_fallthru
      _
    // Predicated region
    $region10: #{tpu_custom_call.1} parent=1 // pred_check
      _
    $region11: #{tpu_custom_call.1} parent=1 // pred_check_branch
      %36 = sbr.rel (0) target = $region13
    $region12: #{tpu_custom_call.1} parent=1 // pred_region
      _
    $region13: #{tpu_custom_call.1} parent=1 // pred_fallthru
      _
    // Predicated region
    $region14: #{tpu_custom_call.1} parent=1 // pred_check
      _
    $region15: #{tpu_custom_call.1} parent=1 // pred_check_branch
      %38 = sbr.rel (0) target = $region17
    $region16: #{tpu_custom_call.1} parent=1 // pred_region
      %39 = dma.done [#allocation3], 512
    $region17: #{tpu_custom_call.1} parent=1 // pred_fallthru
      _
    // Predicated region
    $region18: #{tpu_custom_call.1} parent=1 // pred_check
      _
    $region19: #{tpu_custom_call.1} parent=1 // pred_check_branch
      %41 = sbr.rel (0) target = $region21
    $region20: #{tpu_custom_call.1} parent=1 // pred_region
      %42 = dma.done [#allocation6], 1728
    $region21: #{tpu_custom_call.1} parent=1 // pred_fallthru
      _
    %v44 = vld [vmem:[#allocation2] sm:$0xff]
    %v45 = vld [vmem:[#allocation2 + $0x8] sm:$0xff]
    %v46 = vld [vmem:[#allocation2 + $0x10] sm:$0xff]
    %v47 = vld [vmem:[#allocation2 + $0x18] sm:$0xff]
    %v48 = vld [vmem:[#allocation5] sm:$0xf]
    %v49 = vld [vmem:[#allocation5 + $0x4] sm:$0xf]
    %v50 = vld [vmem:[#allocation5 + $0x8] sm:$0xf]
    %v51 = vld [vmem:[#allocation5 + $0xc] sm:$0xf]
    %v52 = vld [vmem:[#allocation5 + $0x10] sm:$0xf]
    %v53 = vld [vmem:[#allocation5 + $0x14] sm:$0xf]
    %v54 = vld [vmem:[#allocation5 + $0x18] sm:$0xf]
    %v55 = vld [vmem:[#allocation5 + $0x1c] sm:$0xf]
    %v56 = vld [vmem:[#allocation5 + $0x20] sm:$0xf]
    %v57 = vld [vmem:[#allocation5 + $0x24] sm:$0xf]
    %v58 = vld [vmem:[#allocation5 + $0x28] sm:$0xf]
    %v59 = vld [vmem:[#allocation5 + $0x2c] sm:$0xf]
    %v60 = vld [vmem:[#allocation5 + $0x30] sm:$0xf]
    %v61 = vld [vmem:[#allocation5 + $0x34] sm:$0xf]
    %v62 = vld [vmem:[#allocation5 + $0x38] sm:$0xf]
    %v63 = vld [vmem:[#allocation5 + $0x3c] sm:$0xf]
    %v64 = vld [vmem:[#allocation5 + $0x40] sm:$0xf]
    %v65 = vld [vmem:[#allocation5 + $0x44] sm:$0xf]
    %v66 = vld [vmem:[#allocation5 + $0x48] sm:$0xf]
    %v67 = vld [vmem:[#allocation5 + $0x4c] sm:$0xf]
    %v68 = vld [vmem:[#allocation5 + $0x50] sm:$0xf]
    %v69 = vld [vmem:[#allocation5 + $0x54] sm:$0xf]
    %v70 = vld [vmem:[#allocation5 + $0x58] sm:$0xf]
    %v71 = vld [vmem:[#allocation5 + $0x5c] sm:$0xf]
    %v72 = vld [vmem:[#allocation5 + $0x60] sm:$0xf]
    %v73 = vld [vmem:[#allocation5 + $0x64] sm:$0xf]
    %v74 = vld [vmem:[#allocation5 + $0x68] sm:$0xf]
    %v79 = vunpack.c.l.b16 %v44
    %v80 = vunpack.c.h.b16 %v44
    %v81 = vunpack.c.l.b16 %v45
    %v82 = vunpack.c.h.b16 %v45
    %v83 = vunpack.c.l.b16 %v46
    %v84 = vunpack.c.h.b16 %v46
    %v85 = vunpack.c.l.b16 %v47
    %v86 = vunpack.c.h.b16 %v47
    %v87 = vpack.c.b16 %v81, %v79
    %v88 = vpack.c.b16 %v82, %v80
    %v89 = vpack.c.b16 %v85, %v83
    %v90 = vpack.c.b16 %v86, %v84
    %v120 = vunpack.c.l.b16 %v48
    %v121 = vunpack.c.l.b16 %v49
    %v122 = vunpack.c.l.b16 %v50
    %v123 = vunpack.c.l.b16 %v51
    %v124 = vunpack.c.l.b16 %v52
    %v125 = vunpack.c.l.b16 %v53
    %v126 = vunpack.c.l.b16 %v54
    %v127 = vunpack.c.l.b16 %v55
    %v128 = vunpack.c.l.b16 %v56
    %v129 = vunpack.c.l.b16 %v57
    %v130 = vunpack.c.l.b16 %v58
    %v131 = vunpack.c.l.b16 %v59
    %v132 = vunpack.c.l.b16 %v60
    %v133 = vunpack.c.l.b16 %v61
    %v134 = vunpack.c.l.b16 %v62
    %v135 = vunpack.c.l.b16 %v63
    %v136 = vunpack.c.l.b16 %v64
    %v137 = vunpack.c.l.b16 %v65
    %v138 = vunpack.c.l.b16 %v66
    %v139 = vunpack.c.l.b16 %v67
    %v140 = vunpack.c.l.b16 %v68
    %v141 = vunpack.c.l.b16 %v69
    %v142 = vunpack.c.l.b16 %v70
    %v143 = vunpack.c.l.b16 %v71
    %v144 = vunpack.c.l.b16 %v72
    %v145 = vunpack.c.l.b16 %v73
    %v146 = vunpack.c.l.b16 %v74
    %v147 = vpack.c.b16 %v121, %v120
    %v148 = vpack.c.b16 %v123, %v122
    %v149 = vpack.c.b16 %v125, %v124
    %v150 = vpack.c.b16 %v127, %v126
    %v151 = vpack.c.b16 %v129, %v128
    %v152 = vpack.c.b16 %v131, %v130
    %v153 = vpack.c.b16 %v133, %v132
    %v154 = vpack.c.b16 %v135, %v134
    %v155 = vpack.c.b16 %v137, %v136
    %v156 = vpack.c.b16 %v139, %v138
    %v157 = vpack.c.b16 %v141, %v140
    %v158 = vpack.c.b16 %v143, %v142
    %v159 = vpack.c.b16 %v145, %v144
    %v160 = vpack.c.b16 %v146, %v146
    %vm174 = vcmask 719872
    %v176 = vsel %vm174, %v88, 0
    %v179 = vsel %vm174, %v90, 0
    %vm181 = vcmask 1043456
    %v183 = vsel %vm181, %v160, 0
    %185 = vmatprep.subr.bf16.mxu0 0
    %186 = vmatpush1.bf16.msra.mxu0 %v154
    %187 = vmatprep.subr.bf16.mxu0 0
    %188 = vmatpush1.bf16.msra.mxu0 %v153
    %189 = vmatprep.subr.bf16.mxu0 0
    %190 = vmatpush1.bf16.msra.mxu0 %v152
    %191 = vmatprep.subr.bf16.mxu0 0
    %192 = vmatpush1.bf16.msra.mxu0 %v151
    %193 = vmatprep.subr.bf16.mxu0 0
    %194 = vmatpush1.bf16.msra.mxu0 %v150
    %195 = vmatprep.subr.bf16.mxu0 0
    %196 = vmatpush1.bf16.msra.mxu0 %v149
    %197 = vmatprep.subr.bf16.mxu0 0
    %198 = vmatpush1.bf16.msra.mxu0 %v148
    %199 = vmatprep.subr.bf16.mxu0 0
    %200 = vmatpush1.bf16.msra.mxu0 %v147
    %201 = vmatprep.subr.bf16.mxu0 0
    %202 = vmatpush2.bf16.msra.mxu0 0
    %203 = vmatprep.subr.bf16.mxu0 0
    %204 = vmatpush2.bf16.msra.mxu0 0
    %205 = vmatprep.subr.bf16.mxu0 0
    %206 = vmatpush2.bf16.msra.mxu0 %v183
    %207 = vmatprep.subr.bf16.mxu0 0
    %208 = vmatpush2.bf16.msra.mxu0 %v159
    %209 = vmatprep.subr.bf16.mxu0 0
    %210 = vmatpush2.bf16.msra.mxu0 %v158
    %211 = vmatprep.subr.bf16.mxu0 0
    %212 = vmatpush2.bf16.msra.mxu0 %v157
    %213 = vmatprep.subr.bf16.mxu0 0
    %214 = vmatpush2.bf16.msra.mxu0 %v156
    %215 = vmatprep.subr.bf16.mxu0 0
    %216 = vmatpush2.bf16.msra.mxu0 %v155
    %217 = vmatprep.mubr.bf16.mxu0 %v176
    %218 = vmatmul.mubr.bf16.gmra.mxu0 %v87
    %v219 = vpop.f32.mrf.mxu0
    %v220 = vadd.f32 0.0, %v219
    %v221 = vpop.f32.mrf.mxu0
    %v222 = vpop.f32.mrf.mxu0
    %v223 = vadd.f32 0.0, %v222
    %v224 = vpop.f32.mrf.mxu0
    %225 = vmatprep.mubr.bf16.mxu0 %v179
    %226 = vmatmul.mubr.bf16.gmra.mxu0 %v89
    %v227 = vpop.f32.mrf.mxu0
    %v228 = vadd.f32 0.0, %v227
    %v229 = vpop.f32.mrf.mxu0
    %v230 = vpop.f32.mrf.mxu0
    %v231 = vadd.f32 0.0, %v230
    %v232 = vpop.f32.mrf.mxu0
    %233 = vdwg.mxu0
    %v234 = vld [vmem:[%s2] sm:$0x1]
    %v235 = vlaneseq
    %v236 = vshrl.u32 %v235, 7
    %v237 = vsub.s32 0, %v236
    %v238 = vrot.slane %v234, %v237
    %v239 = vmul.f32 %v220, %v238
    %v240 = vmul.f32 %v223, %v238
    %v241 = vmul.f32 %v228, %v238
    %v242 = vmul.f32 %v231, %v238
    %v243 = vld [vmem:[%s2 + $0x1] sm:$0x1]
    %v244 = vlaneseq
    %v245 = vshrl.u32 %v244, 7
    %v246 = vsub.s32 0, %v245
    %v247 = vrot.slane %v243, %v246
    %v248 = vadd.f32 %v239, %v247
    %v249 = vadd.f32 %v240, %v247
    %v250 = vadd.f32 %v241, %v247
    %v251 = vadd.f32 %v242, %v247
    %v252 = vmax.f32 %v248, 0.0
    %v253 = vmax.f32 %v249, 0.0
    %v254 = vmax.f32 %v250, 0.0
    %v255 = vmax.f32 %v251, 0.0
    %v256 = vpack.c.bf16 %v253, %v252
    %v257 = vpack.c.bf16 %v255, %v254
    %v260 = vunpack.c.l.b16 %v256
    %v261 = vunpack.c.h.b16 %v256
    %v262 = vunpack.c.l.b16 %v257
    %v263 = vunpack.c.h.b16 %v257
    %v264 = vpack.c.b16 %v260, %v260
    %v265 = vpack.c.b16 %v261, %v261
    %v266 = vpack.c.b16 %v262, %v262
    %v267 = vpack.c.b16 %v263, %v263
    %272 = vst [vmem:[#allocation7] sm:$0xf] %v264
    %273 = vst [vmem:[#allocation7 + $0x4] sm:$0xf] %v265
    %274 = vst [vmem:[#allocation7 + $0x8] sm:$0xf] %v266
    %275 = vst [vmem:[#allocation7 + $0xc] sm:$0xf] %v267
    // Predicated region
    $region22: #{tpu_custom_call.1} parent=1 // pred_check
      _
    $region23: #{tpu_custom_call.1} parent=1 // pred_check_branch
      %277 = sbr.rel (0) target = $region25
    $region24: #{tpu_custom_call.1} parent=1 // pred_region
      %s279 = ssub.s32 256, 256
      %280 = vsyncadd [#allocation4], %s279
      %s281 = sshll.u32 [#allocation7], 4
      %s282 = int_to_ptr.vmem [resolvable:$true] %s281
      %287 = dma.vmem_to_hbm [thread:$0]  %s282, 256, %s3, [#allocation4], 64, 64, 4
    $region25: #{tpu_custom_call.1} parent=1 // pred_fallthru
      _
    // Predicated region
    $region26: #{tpu_custom_call.1} parent=1 // pred_check
      _
    $region27: #{tpu_custom_call.1} parent=1 // pred_check_branch
      %289 = sbr.rel (0) target = $region29
    $region28: #{tpu_custom_call.1} parent=1 // pred_region
      %290 = dma.done [#allocation4], 256
    $region29: #{tpu_custom_call.1} parent=1 // pred_fallthru
      _
    %291 = vsyncpa [#allocation3], 1
    %292 = vsyncpa [#allocation6], 1
    %293 = vsyncpa [#allocation4], 1

</llo_original>
